<compile_context>
chip_gen: v6e
topology: v6e:2x2x1
jax: 0.10.0
libtpu: 0.0.40
codegen_flags: <defaults>
</compile_context>

<pallas_src>
import functools

import jax
import jax.numpy as jnp
from jax.experimental import pallas as pl
from jax.experimental.pallas import tpu as pltpu

LANE = 128                            # vreg lane width (last slab dim)
MAX_TILE_BYTES = 4 * 1024 * 1024      # 4 MiB per tile per buffer
VMEM_LIMIT_BYTES = 32 * 1024 * 1024   # in+out double-buffered = 16 MiB + scratch headroom
SPLIT_BYTES = 256 * 1024              # split into >=2 grid steps above this slab size


def _sine_kernel(x_ref, o_ref, *, scale: float):
    x = x_ref[...]
    # Compute in f32 for sub-32-bit inputs: sin's range reduction degrades fast
    # in bf16; the extra VPU work is hidden under the HBM DMA.
    cdt = jnp.float32 if jnp.dtype(x.dtype).itemsize < 4 else x.dtype
    xf = x.astype(cdt)
    if scale != 1.0:
        xf = xf * jnp.asarray(scale, dtype=cdt)
    o_ref[...] = jnp.sin(xf).astype(o_ref.dtype)


def _round_up(v: int, m: int) -> int:
    return ((v + m - 1) // m) * m


def _cdiv(a: int, b: int) -> int:
    return -(-a // b)


def _choose_row_tile(rows: int, sub: int, itemsize: int) -> int:
    """Pick a row tile (multiple of `sub`, which is itself a multiple of 8)."""
    max_rows = max(sub, (MAX_TILE_BYTES // (LANE * itemsize)) // sub * sub)
    slab_bytes = rows * LANE * itemsize
    if rows <= max_rows:
        if slab_bytes >= SPLIT_BYTES:
            # Two grid steps so v7x's 2 TensorCores both get work; on v5e/v6e
            # this only costs ~0.35 us, negligible at this size.
            return max(sub, _round_up(_cdiv(rows, 2), sub))
        return _round_up(rows, sub)          # single step for tiny tensors
    # Multi-tile: keep the step count even so neither v7x TC idles on the tail.
    steps = _cdiv(rows, max_rows)
    if steps % 2:
        steps += 1
    return max(sub, _round_up(_cdiv(rows, steps), sub))


@functools.partial(jax.jit, static_argnames=("scale",))
def sine_activation(x: jax.Array, scale: float = 1.0) -> jax.Array:
    orig_shape = x.shape
    n = x.size
    if n == 0:
        return x  # nothing to do for empty tensors

    itemsize = jnp.dtype(x.dtype).itemsize
    sub = 8 * max(1, 4 // itemsize)   # packed sublanes: f32 -> 8, bf16 -> 16, int8/fp8 -> 32

    flat = x.reshape(-1)
    # Pad only to a multiple of 128 lanes; the trailing partial row block is
    # masked by Pallas (block rows stay a multiple of 8, the array need not be).
    n_pad = (-n) % LANE
    if n_pad:
        flat = jnp.pad(flat, (0, n_pad))
    slab = flat.reshape(-1, LANE)     # keeps x.dtype end-to-end
    rows = slab.shape[0]

    row_tile = _choose_row_tile(rows, sub, itemsize)
    grid = (pl.cdiv(rows, row_tile),)

    out_slab = pl.pallas_call(
        functools.partial(_sine_kernel, scale=float(scale)),
        out_shape=jax.ShapeDtypeStruct(slab.shape, slab.dtype),
        grid=grid,
        in_specs=[pl.BlockSpec((row_tile, LANE), lambda i: (i, 0))],
        out_specs=pl.BlockSpec((row_tile, LANE), lambda i: (i, 0)),
        compiler_params=pltpu.CompilerParams(
            dimension_semantics=("parallel",),
            vmem_limit_bytes=VMEM_LIMIT_BYTES,
        ),
    )(slab)

    if n_pad:
        return out_slab.reshape(-1)[:n].reshape(orig_shape)
    return out_slab.reshape(orig_shape)


if __name__ == "__main__":
    key = jax.random.PRNGKey(0)

    # Shape consistent with a typical NCHW activation tensor.
    x = jax.random.normal(key, (2, 4, 16, 16), dtype=jnp.float32)
    scale = 1.0  # SineActivation default; module has no learnable params.

    y = sine_activation(x, scale=scale)
    jax.block_until_ready(y)
    assert y.shape == x.shape and y.dtype == x.dtype
    assert jnp.allclose(y, jnp.sin(scale * x), atol=1e-6, rtol=1e-6)

    # Non-lane-aligned shape + non-unit scale (exercises the masked edge block).
    x2 = jax.random.normal(jax.random.PRNGKey(1), (3, 5, 7), dtype=jnp.float32)
    y2 = sine_activation(x2, scale=2.5)
    jax.block_until_ready(y2)
    assert jnp.allclose(y2, jnp.sin(2.5 * x2), atol=1e-6, rtol=1e-6)

    # Medium unaligned tensor: lane pad + partial trailing row block, single step.
    x3 = jax.random.normal(jax.random.PRNGKey(2), (3, 1000, 7), dtype=jnp.float32)
    y3 = sine_activation(x3, scale=30.0)
    jax.block_until_ready(y3)
    assert jnp.allclose(y3, jnp.sin(30.0 * x3), atol=1e-5, rtol=1e-5)

    # >= 256 KiB slab: exercises the even >=2-step grid path (2 TC friendly).
    x4 = jax.random.normal(jax.random.PRNGKey(3), (2, 4, 128, 128), dtype=jnp.float32)
    y4 = sine_activation(x4, scale=1.7)
    jax.block_until_ready(y4)
    assert jnp.allclose(y4, jnp.sin(1.7 * x4), atol=1e-6, rtol=1e-6)

    # bf16 path: 16-row sublane alignment, f32 compute inside the kernel.
    x5 = jax.random.normal(jax.random.PRNGKey(4), (2, 4, 16, 16), dtype=jnp.bfloat16)
    y5 = sine_activation(x5, scale=2.5)
    jax.block_until_ready(y5)
    ref5 = jnp.sin(2.5 * x5.astype(jnp.float32)).astype(jnp.bfloat16)
    assert y5.dtype == jnp.bfloat16
    assert jnp.allclose(y5.astype(jnp.float32), ref5.astype(jnp.float32), atol=2e-2)

    print("KERNEL_OK")
</pallas_src>

<mosaic_0001>
module attributes {stable_mosaic.version = 11 : i64} {
  func.func @_sine_kernel(%arg0: i32, %arg1: memref<16x128xf32, #tpu.memory_space<vmem>>, %arg2: memref<16x128xf32, #tpu.memory_space<vmem>>) attributes {dimension_semantics = [#tpu.dimension_semantics<parallel>], iteration_bounds = array<i64: 1>, scalar_prefetch = 0 : i64, scratch_operands = 0 : i64, tpu.core_type = #tpu.core_type<tc>, window_params = [{transform_indices = @transform_0, window_bounds = array<i64: 16, 128>}, {transform_indices = @transform_1, window_bounds = array<i64: 16, 128>}]} {
    %c0 = arith.constant 0 : index
    %c0_0 = arith.constant 0 : index
    %0 = vector.load %arg1[%c0, %c0_0] : memref<16x128xf32, #tpu.memory_space<vmem>>, vector<16x128xf32>
    %1 = math.sin %0 : vector<16x128xf32>
    %c0_1 = arith.constant 0 : index
    %c0_2 = arith.constant 0 : index
    %2 = vector.load %arg2[%c0_1, %c0_2] : memref<16x128xf32, #tpu.memory_space<vmem>>, vector<16x128xf32>
    tpu.vector_store %arg2[%c0_1, %c0_2], %1 {strides = array<i32>} : memref<16x128xf32, #tpu.memory_space<vmem>>, vector<16x128xf32>,
    return
  }
  func.func @transform_0(%arg0: i32) -> (i32, i32) {
    %c0_i32 = arith.constant 0 : i32
    %c0_i32_0 = arith.constant 0 : i32
    return %arg0, %c0_i32 : i32, i32
  }
  func.func @transform_1(%arg0: i32) -> (i32, i32) {
    %c0_i32 = arith.constant 0 : i32
    %c0_i32_0 = arith.constant 0 : i32
    return %arg0, %c0_i32 : i32, i32
  }
}

</mosaic_0001>

<llo_original>
// kernel: sine_activation.1
$region0: #{sine_activation.1}
  #allocation0 [shape = 'u32[]', space=smem, size = 0x4, offset = 0x4, fixed_abs, tag = 'smem constant byte address 0x4 - core index']
  #allocation1 [shape = 'u32[144,128]{1,0:T(1,128)}', space=vmem, size = 0x12000, scoped, tag = 'internal scratch']
  %s0 = inlined_call_operand.vmem [shape: f32[16,128], index: 0, kind: input, shape index: {}]
  %s1 = inlined_call_operand.vmem [shape: f32[16,128], index: 1, kind: output, shape index: {}]
  %s2 = sld [smem:[#allocation0]]
  $region14: #{sine_activation.1} parent=0
    _
  %s4 = ssub.s32 1, %s2
  %s5 = scalar_select 0, %s4, %s2
  // Predicated region
  $region2: #{sine_activation.1} parent=0 // pred_check
    _
  $region3: #{sine_activation.1} parent=0 // pred_check_branch
    %7 = sbr.rel (0) target = $region5
  $region4: #{sine_activation.1} parent=0 // pred_region
    _
  $region5: #{sine_activation.1} parent=0 // pred_fallthru
    _
  %v8 = vld [vmem:[%s0] sm:$0xff]
  %v9 = vld [vmem:[%s0 + $0x8] sm:$0xff]
  %v10 = vand.u32 2147483647, %v8
  %vm11 = vcmp.le.f32.partialorder %v10, 0.7853982
  %vm12 = vcmp.lt.s32.totalorder %v8, 0
  %v13 = vand.u32 %v8, 2139095040
  %v14 = vshrl.u32 %v13, 23
  %v15 = vsub.s32 %v14, 127
  %v16 = vand.u32 2147483647, %v8
  %v17 = vand.u32 %v16, 8388607
  %v18 = vor.u32 %v17, 8388608
  %v19 = vsub.s32 0, %v18
  %v20 = vadd.s32 %v15, 1
  %vm21 = vcmp.gt.s32.totalorder %v20, 0
  %v22 = vsel %vm21, %v20, 0
  %v23 = vshrl.u32 %v22, 5
  %v24 = vand.u32 %v22, 31
  %v25 = vsub.s32 32, %v24
  %v26 = vshrl.u32 683565275, %v25
  %v27 = vshll.u32 683565275, %v24
  %v28 = vshrl.u32 2475754826, %v25
  %v29 = vor.u32 %v27, %v28
  %v30 = vshll.u32 2475754826, %v24
  %v31 = vshrl.u32 2131351028, %v25
  %v32 = vor.u32 %v30, %v31
  %v33 = vshll.u32 2131351028, %v24
  %v34 = vshrl.u32 2102212464, %v25
  %v35 = vor.u32 %v33, %v34
  %v36 = vshll.u32 2102212464, %v24
  %v37 = vshrl.u32 920167782, %v25
  %v38 = vor.u32 %v36, %v37
  %v39 = vshll.u32 920167782, %v24
  %v40 = vshrl.u32 1326507024, %v25
  %v41 = vor.u32 %v39, %v40
  %vm42 = vcmp.lt.s32.totalorder %v23, 1
  %vm43 = vcmp.lt.s32.totalorder %v23, 2
  %vm44 = vcmp.lt.s32.totalorder %v23, 3
  %vm45 = vcmp.lt.s32.totalorder %v23, 4
  %v46 = vsel %vm42, %v26, %v29
  %v47 = vsel %vm45, %v35, 2102212464
  %v48 = vsel %vm44, %v32, %v47
  %v49 = vsel %vm43, %v46, %v48
  %v50 = vsel %vm42, %v29, %v32
  %v51 = vsel %vm45, %v38, 920167782
  %v52 = vsel %vm44, %v35, %v51
  %v53 = vsel %vm43, %v50, %v52
  %v54 = vsel %vm42, %v32, %v35
  %v55 = vsel %vm45, %v41, 1326507024
  %v56 = vsel %vm44, %v38, %v55
  %v57 = vsel %vm43, %v54, %v56
  %v58 = vshll.u32 %v18, 8
  %v59 = vmul.u32.u64.compose %v58, %v57
  %v60 = vextract.low.u32 %v59
  %v61 = vextract.high.u32 %v59
  %v62 = vmul.u32.u64.compose %v58, %v53
  %v63 = vextract.low.u32 %v62
  %v64 = vextract.high.u32 %v62
  %v65 = vmul.u32 %v58, %v49
  %v66 = vadd.s32 %v61, %v63
  %vm67 = vc.u32 %v61, %v63
  %v68 = vadd.s32 %v64, 1
  %v69 = vsel %vm67, %v68, %v64
  %v70 = vadd.s32 %v65, %v69
  %v71 = vadd.s32 %v70, 536870912
  %v72 = vshrl.u32 %v71, 30
  %v73 = vshll.u32 %v72, 30
  %v74 = vsub.s32 %v70, %v73
  %vm75 = vcmp.lt.s32.totalorder %v74, 0
  %v76 = vsub.s32 0, %v74
  %v77 = vsel %vm75, %v76, %v74
  %v78 = vclz %v77
  %v79 = vsub.s32 %v78, 2
  %vm80 = vcmp.gt.s32.totalorder 0, %v79
  %v81 = vsel %vm80, 0, %v79
  %v82 = vsub.s32 32, %v81
  %v83 = vshll.u32 %v74, %v81
  %v84 = vshrl.u32 %v66, %v82
  %v85 = vor.u32 %v83, %v84
  %v86 = vsub.s32 4294967266, %v81
  %v87 = vadd.s32 %v86, 127
  %v88 = vshll.u32 %v87, 23
  %v89 = vor.u32 4788187, %v88
  %v90 = vand.u32 2147483647, %v89
  %v92 = vcvt.s32.f32 %v85
  %v93 = vmul.f32 %v92, %v90
  %v94 = vxor.u32 %v93, 2147483648
  %v95 = vsel %vm12, %v94, %v93
  %v96 = vsub.s32 4, %v72
  %v97 = vsel %vm12, %v96, %v72
  %v98 = vsel %vm11, %v8, %v95
  %v99 = vsel %vm11, 0, %v97
  %v100 = vcosq.f32.pop %v98
  %v101 = vsinq.f32.pop %v98
  %vm102 = vweird.f32 %v8
  %v103 = vadd.s32 %v99, 3
  %v104 = vand.u32 %v103, 3
  %vm105 = vcmp.lt.s32.totalorder %v104, 2
  %vm106 = vcmp.eq.s32.totalorder %v104, 0
  %v107 = vxor.u32 %v101, 2147483648
  %v108 = vsel %vm106, %v100, %v107
  %vm109 = vcmp.eq.s32.totalorder %v104, 2
  %v110 = vxor.u32 %v100, 2147483648
  %v111 = vsel %vm109, %v110, %v101
  %v112 = vsel %vm105, %v108, %v111
  %v113 = vsel %vm102, nan, %v112
  %v114 = vand.u32 2147483647, %v9
  %vm115 = vcmp.le.f32.partialorder %v114, 0.7853982
  %vm116 = vcmp.lt.s32.totalorder %v9, 0
  %v117 = vand.u32 %v9, 2139095040
  %v118 = vshrl.u32 %v117, 23
  %v119 = vsub.s32 %v118, 127
  %v120 = vand.u32 2147483647, %v9
  %v121 = vand.u32 %v120, 8388607
  %v122 = vor.u32 %v121, 8388608
  %v123 = vsub.s32 0, %v122
  %v124 = vadd.s32 %v119, 1
  %vm125 = vcmp.gt.s32.totalorder %v124, 0
  %v126 = vsel %vm125, %v124, 0
  %v127 = vshrl.u32 %v126, 5
  %v128 = vand.u32 %v126, 31
  %v129 = vsub.s32 32, %v128
  %v130 = vshrl.u32 683565275, %v129
  %v131 = vshll.u32 683565275, %v128
  %v132 = vshrl.u32 2475754826, %v129
  %v133 = vor.u32 %v131, %v132
  %v134 = vshll.u32 2475754826, %v128
  %v135 = vshrl.u32 2131351028, %v129
  %v136 = vor.u32 %v134, %v135
  %v137 = vshll.u32 2131351028, %v128
  %v138 = vshrl.u32 2102212464, %v129
  %v139 = vor.u32 %v137, %v138
  %v140 = vshll.u32 2102212464, %v128
  %v141 = vshrl.u32 920167782, %v129
  %v142 = vor.u32 %v140, %v141
  %v143 = vshll.u32 920167782, %v128
  %v144 = vshrl.u32 1326507024, %v129
  %v145 = vor.u32 %v143, %v144
  %vm146 = vcmp.lt.s32.totalorder %v127, 1
  %vm147 = vcmp.lt.s32.totalorder %v127, 2
  %vm148 = vcmp.lt.s32.totalorder %v127, 3
  %vm149 = vcmp.lt.s32.totalorder %v127, 4
  %v150 = vsel %vm146, %v130, %v133
  %v151 = vsel %vm149, %v139, 2102212464
  %v152 = vsel %vm148, %v136, %v151
  %v153 = vsel %vm147, %v150, %v152
  %v154 = vsel %vm146, %v133, %v136
  %v155 = vsel %vm149, %v142, 920167782
  %v156 = vsel %vm148, %v139, %v155
  %v157 = vsel %vm147, %v154, %v156
  %v158 = vsel %vm146, %v136, %v139
  %v159 = vsel %vm149, %v145, 1326507024
  %v160 = vsel %vm148, %v142, %v159
  %v161 = vsel %vm147, %v158, %v160
  %v162 = vshll.u32 %v122, 8
  %v163 = vmul.u32.u64.compose %v162, %v161
  %v164 = vextract.low.u32 %v163
  %v165 = vextract.high.u32 %v163
  %v166 = vmul.u32.u64.compose %v162, %v157
  %v167 = vextract.low.u32 %v166
  %v168 = vextract.high.u32 %v166
  %v169 = vmul.u32 %v162, %v153
  %v170 = vadd.s32 %v165, %v167
  %vm171 = vc.u32 %v165, %v167
  %v172 = vadd.s32 %v168, 1
  %v173 = vsel %vm171, %v172, %v168
  %v174 = vadd.s32 %v169, %v173
  %v175 = vadd.s32 %v174, 536870912
  %v176 = vshrl.u32 %v175, 30
  %v177 = vshll.u32 %v176, 30
  %v178 = vsub.s32 %v174, %v177
  %vm179 = vcmp.lt.s32.totalorder %v178, 0
  %v180 = vsub.s32 0, %v178
  %v181 = vsel %vm179, %v180, %v178
  %v182 = vclz %v181
  %v183 = vsub.s32 %v182, 2
  %vm184 = vcmp.gt.s32.totalorder 0, %v183
  %v185 = vsel %vm184, 0, %v183
  %v186 = vsub.s32 32, %v185
  %v187 = vshll.u32 %v178, %v185
  %v188 = vshrl.u32 %v170, %v186
  %v189 = vor.u32 %v187, %v188
  %v190 = vsub.s32 4294967266, %v185
  %v191 = vadd.s32 %v190, 127
  %v192 = vshll.u32 %v191, 23
  %v193 = vor.u32 4788187, %v192
  %v194 = vand.u32 2147483647, %v193
  %v196 = vcvt.s32.f32 %v189
  %v197 = vmul.f32 %v196, %v194
  %v198 = vxor.u32 %v197, 2147483648
  %v199 = vsel %vm116, %v198, %v197
  %v200 = vsub.s32 4, %v176
  %v201 = vsel %vm116, %v200, %v176
  %v202 = vsel %vm115, %v9, %v199
  %v203 = vsel %vm115, 0, %v201
  %v204 = vcosq.f32.pop %v202
  %v205 = vsinq.f32.pop %v202
  %vm206 = vweird.f32 %v9
  %v207 = vadd.s32 %v203, 3
  %v208 = vand.u32 %v207, 3
  %vm209 = vcmp.lt.s32.totalorder %v208, 2
  %vm210 = vcmp.eq.s32.totalorder %v208, 0
  %v211 = vxor.u32 %v205, 2147483648
  %v212 = vsel %vm210, %v204, %v211
  %vm213 = vcmp.eq.s32.totalorder %v208, 2
  %v214 = vxor.u32 %v204, 2147483648
  %v215 = vsel %vm213, %v214, %v205
  %v216 = vsel %vm209, %v212, %v215
  %v217 = vsel %vm206, nan, %v216
  %218 = vst [vmem:[%s1] sm:$0xff] %v113
  %219 = vst [vmem:[%s1 + $0x8] sm:$0xff] %v217
  // Predicated region
  $region6: #{sine_activation.1} parent=0 // pred_check
    _
  $region7: #{sine_activation.1} parent=0 // pred_check_branch
    %221 = sbr.rel (0) target = $region9
  $region8: #{sine_activation.1} parent=0 // pred_region
    _
  $region9: #{sine_activation.1} parent=0 // pred_fallthru
    _
  // Predicated region
  $region10: #{sine_activation.1} parent=0 // pred_check
    _
  $region11: #{sine_activation.1} parent=0 // pred_check_branch
    %223 = sbr.rel (0) target = $region13
  $region12: #{sine_activation.1} parent=0 // pred_region
    _
  $region13: #{sine_activation.1} parent=0 // pred_fallthru
    _

</llo_original>
